<compile_context>
chip_gen: v7x
topology: tpu7x:2x2x1
jax: 0.10.0
libtpu: 0.0.40
codegen_flags: <defaults>
</compile_context>

<pallas_src>
import functools

import jax
import jax.numpy as jnp
from jax.experimental import pallas as pl
from jax.experimental.pallas import tpu as pltpu

LANE = 128
SUBLANE = 8


def _round_up(n, m):
    return ((n + m - 1) // m) * m


def _cdiv(a, b):
    return -(-a // b)


# -----------------------------------------------------------------------------
# Kernel: fused 5-layer MLP on one (TB, c_in) activation tile.
# -----------------------------------------------------------------------------
def _mlp_kernel(x_ref,
                w1_ref, b1_ref,
                w2_ref, b2_ref,
                w3_ref, b3_ref,
                w4_ref, b4_ref,
                w5_ref, b5_ref,
                o_ref):
    """x / weights are bf16 (MXU inputs); accumulate, bias add and ReLU in f32.
    Inter-layer activations never leave VMEM/vregs."""

    def layer(h_bf16, w_ref, b_ref, relu):
        acc = jnp.dot(h_bf16, w_ref[...], preferred_element_type=jnp.float32)
        acc = acc + b_ref[...]                       # f32 bias add (broadcast over rows)
        if relu:
            acc = jnp.maximum(acc, 0.0).astype(jnp.bfloat16)
        return acc

    h = x_ref[...]                                   # bf16 [TB, c_in] (K padded in-register)
    h = layer(h, w1_ref, b1_ref, True)
    h = layer(h, w2_ref, b2_ref, True)
    h = layer(h, w3_ref, b3_ref, True)
    h = layer(h, w4_ref, b4_ref, True)
    h = layer(h, w5_ref, b5_ref, False)              # f32 [TB, c_out] (unpadded)
    o_ref[...] = h.astype(o_ref.dtype)


# -----------------------------------------------------------------------------
# One-time parameter preparation (hoisted off the per-call path).
# -----------------------------------------------------------------------------
def prepare_params(params):
    """Pad + cast the 5 (W [in,out], b [1,out]) pairs ONCE.

    Only internal feature dims (h1..h4) are lane-padded to multiples of 128 so every
    inter-layer MXU operand is vreg-aligned; the input dim (c_in) and output dim (c_out)
    stay exact so activation reads / output writes keep their true width.  Padded rows,
    cols and bias lanes are exactly zero -> padding cannot leak through ReLU.
    """
    dims = [params[0][0].shape[0]] + [w.shape[1] for w, _ in params]
    dims_p = [dims[0]] + [_round_up(d, LANE) for d in dims[1:-1]] + [dims[-1]]

    flat = []
    for li, (w, b) in enumerate(params):
        in_p, out_p = dims_p[li], dims_p[li + 1]
        w_p = jnp.zeros((in_p, out_p), jnp.bfloat16)
        w_p = w_p.at[: w.shape[0], : w.shape[1]].set(w.astype(jnp.bfloat16))
        b_p = jnp.zeros((1, out_p), jnp.float32)
        b_p = b_p.at[:, : b.shape[1]].set(b.astype(jnp.float32))
        flat.extend([w_p, b_p])
    return tuple(flat)


# -----------------------------------------------------------------------------
# Forward wrapper.
# -----------------------------------------------------------------------------
@functools.partial(jax.jit, static_argnames=("batch_tile",))
def four_layer_relu_forward(x, prepared, *, batch_tile=256):
    """x: [B, c_in] f32; prepared: output of prepare_params(). Returns [B, c_out] f32."""
    B, c_in = x.shape
    c_out = prepared[-2].shape[1]                    # W5's (unpadded) output dim

    # ---- batch tiling ---------------------------------------------------------------
    # Near-balanced tiles (padding < one tile even for unlucky B such as 520) and, when
    # B >= 16, at least 2 tiles so the "parallel" batch axis can shard over v7x's 2 TCs.
    if B >= 2 * SUBLANE:
        n_tiles = max(2, _cdiv(B, batch_tile))
        TB = min(batch_tile, _round_up(_cdiv(B, n_tiles), SUBLANE))
    else:
        TB = _round_up(max(B, 1), SUBLANE)
    B_p = _round_up(B, TB)
    grid = (B_p // TB,)

    # ---- activations: bf16 cast; pad batch rows only (feature dim stays c_in) --------
    x_bf = x.astype(jnp.bfloat16)
    if B_p != B:
        x_bf = jnp.zeros((B_p, c_in), jnp.bfloat16).at[:B, :].set(x_bf)

    # ---- VMEM budget sanity (v7x: 64 MiB physical / 32 MiB scoped default) -----------
    resident = sum(int(a.size) * a.dtype.itemsize for a in prepared)   # single-buffered
    streaming = 2 * TB * (c_in * 2 + c_out * 4)                        # double-buffered x/out
    assert resident + streaming < 24 * 1024 * 1024, (
        "resident-weight design would overflow the VMEM budget; use a K/N-tiled grid "
        "with streamed weight blocks instead")
    # TODO(synk): streamed-weight variant (K/N-tiled inner 'arbitrary' axis + f32 acc
    # scratch) for hidden dims in the few-thousand range on v7x (64 MiB VMEM).

    # ---- BlockSpecs -------------------------------------------------------------------
    def const_spec(arr):
        nd = arr.ndim
        # Full-array block, constant block index -> VMEM-resident across grid steps;
        # single-buffered since a constant block never needs a second pipeline buffer.
        return pl.BlockSpec(arr.shape, lambda i, _nd=nd: (0,) * _nd,
                            pipeline_mode=pl.Buffered(1))

    in_specs = ([pl.BlockSpec((TB, c_in), lambda i: (i, 0))]
                + [const_spec(a) for a in prepared])
    out_spec = pl.BlockSpec((TB, c_out), lambda i: (i, 0))

    # ---- advisory cost estimate for XLA scheduling around the custom call ------------
    flops = 2 * B_p * sum(prepared[2 * li].shape[0] * prepared[2 * li].shape[1]
                          for li in range(5))
    bytes_accessed = int(x_bf.size * 2 + resident + B_p * c_out * 4)
    cost = pl.CostEstimate(flops=flops, transcendentals=0, bytes_accessed=bytes_accessed)

    out = pl.pallas_call(
        _mlp_kernel,
        out_shape=jax.ShapeDtypeStruct((B_p, c_out), jnp.float32),
        grid_spec=pltpu.PrefetchScalarGridSpec(
            num_scalar_prefetch=0,
            grid=grid,
            in_specs=in_specs,
            out_specs=out_spec,
        ),
        compiler_params=pltpu.CompilerParams(
            dimension_semantics=("parallel",),       # shard batch tiles over v7x's 2 TCs
            vmem_limit_bytes=32 * 1024 * 1024,
        ),
        cost_estimate=cost,
    )(x_bf, *prepared)

    return out[:B] if B_p != B else out


# -----------------------------------------------------------------------------
# Init + references
# -----------------------------------------------------------------------------
def init_linear(key, fan_in, fan_out):
    """Deterministic init mimicking nn.Linear's uniform(-1/sqrt(fan_in), 1/sqrt(fan_in)).
    Stored as [fan_in, fan_out] (transpose of PyTorch's [out, in]) so forward is x @ W."""
    kw, kb = jax.random.split(key)
    bound = 1.0 / jnp.sqrt(jnp.float32(fan_in))
    w = jax.random.uniform(kw, (fan_in, fan_out), jnp.float32, -bound, bound)
    b = jax.random.uniform(kb, (1, fan_out), jnp.float32, -bound, bound)
    return w, b


def reference_forward_f32(x, params):
    h = x
    for i, (w, b) in enumerate(params):
        h = h @ w + b
        if i < len(params) - 1:
            h = jnp.maximum(h, 0.0)
    return h


def reference_forward_bf16(x, params):
    """Matches the kernel's mixed precision (bf16 MXU operands, f32 accumulate/elementwise)."""
    h = x.astype(jnp.bfloat16)
    for i, (w, b) in enumerate(params):
        h = jnp.dot(h, w.astype(jnp.bfloat16),
                    preferred_element_type=jnp.float32) + b
        if i < len(params) - 1:
            h = jnp.maximum(h, 0.0).astype(jnp.bfloat16)
    return h


if __name__ == "__main__":
    # Small shapes consistent with FourLayerReLU(c_in, h1, h2, h3, h4, c_out).
    B = 8
    c_in, c_h1, c_h2, c_h3, c_h4, c_out = 16, 32, 32, 32, 32, 8

    key = jax.random.PRNGKey(0)
    kx, k1, k2, k3, k4, k5 = jax.random.split(key, 6)

    x = jax.random.normal(kx, (B, c_in), jnp.float32)
    params = [
        init_linear(k1, c_in, c_h1),
        init_linear(k2, c_h1, c_h2),
        init_linear(k3, c_h2, c_h3),
        init_linear(k4, c_h3, c_h4),
        init_linear(k5, c_h4, c_out),
    ]

    prepared = prepare_params(params)          # pad + bf16-cast ONCE; reused per call
    prepared = jax.block_until_ready(prepared)

    out = four_layer_relu_forward(x, prepared)
    out = jax.block_until_ready(out)
    assert out.shape == (B, c_out)
    assert out.dtype == jnp.float32

    ref_bf16 = reference_forward_bf16(x, params)   # precision-matched reference
    ref_f32 = reference_forward_f32(x, params)     # full-precision sanity reference

    assert jnp.allclose(out, ref_bf16, atol=1e-2, rtol=1e-2), "mismatch vs bf16 reference"
    assert jnp.allclose(out, ref_f32, atol=5e-2, rtol=5e-2), "mismatch vs f32 reference"

    print("KERNEL_OK")
</pallas_src>

<mosaic_0001>
module attributes {stable_mosaic.version = 11 : i64} {
  func.func @_mlp_kernel(%arg0: i32, %arg1: memref<8x16xbf16, #tpu.memory_space<vmem>>, %arg2: memref<16x128xbf16, #tpu.memory_space<vmem>>, %arg3: memref<1x128xf32, #tpu.memory_space<vmem>>, %arg4: memref<128x128xbf16, #tpu.memory_space<vmem>>, %arg5: memref<1x128xf32, #tpu.memory_space<vmem>>, %arg6: memref<128x128xbf16, #tpu.memory_space<vmem>>, %arg7: memref<1x128xf32, #tpu.memory_space<vmem>>, %arg8: memref<128x128xbf16, #tpu.memory_space<vmem>>, %arg9: memref<1x128xf32, #tpu.memory_space<vmem>>, %arg10: memref<128x8xbf16, #tpu.memory_space<vmem>>, %arg11: memref<1x8xf32, #tpu.memory_space<vmem>>, %arg12: memref<8x8xf32, #tpu.memory_space<vmem>>) attributes {dimension_semantics = [#tpu.dimension_semantics<parallel>], iteration_bounds = array<i64: 1>, scalar_prefetch = 0 : i64, scratch_operands = 0 : i64, tpu.core_type = #tpu.core_type<tc>, window_params = [{transform_indices = @transform_0, window_bounds = array<i64: 8, 16>}, {pipeline_mode = #tpu.pipeline_mode<synchronous>, transform_indices = @transform_1, window_bounds = array<i64: 16, 128>}, {pipeline_mode = #tpu.pipeline_mode<synchronous>, transform_indices = @transform_2, window_bounds = array<i64: 1, 128>}, {pipeline_mode = #tpu.pipeline_mode<synchronous>, transform_indices = @transform_3, window_bounds = array<i64: 128, 128>}, {pipeline_mode = #tpu.pipeline_mode<synchronous>, transform_indices = @transform_4, window_bounds = array<i64: 1, 128>}, {pipeline_mode = #tpu.pipeline_mode<synchronous>, transform_indices = @transform_5, window_bounds = array<i64: 128, 128>}, {pipeline_mode = #tpu.pipeline_mode<synchronous>, transform_indices = @transform_6, window_bounds = array<i64: 1, 128>}, {pipeline_mode = #tpu.pipeline_mode<synchronous>, transform_indices = @transform_7, window_bounds = array<i64: 128, 128>}, {pipeline_mode = #tpu.pipeline_mode<synchronous>, transform_indices = @transform_8, window_bounds = array<i64: 1, 128>}, {pipeline_mode = #tpu.pipeline_mode<synchronous>, transform_indices = @transform_9, window_bounds = array<i64: 128, 8>}, {pipeline_mode = #tpu.pipeline_mode<synchronous>, transform_indices = @transform_10, window_bounds = array<i64: 1, 8>}, {transform_indices = @transform_11, window_bounds = array<i64: 8, 8>}]} {
    %c0 = arith.constant 0 : index
    %c0_0 = arith.constant 0 : index
    %0 = vector.load %arg1[%c0, %c0_0] : memref<8x16xbf16, #tpu.memory_space<vmem>>, vector<8x16xbf16>
    %c0_1 = arith.constant 0 : index
    %c0_2 = arith.constant 0 : index
    %1 = vector.load %arg2[%c0_1, %c0_2] : memref<16x128xbf16, #tpu.memory_space<vmem>>, vector<16x128xbf16>
    %cst = arith.constant dense<0.000000e+00> : vector<8x128xf32>
    %2 = tpu.matmul %0, %1, %cst {dimension_numbers = #tpu.dot_dimension_numbers<[1], [0], [0], [1], [0, 0, 1, 1], [], []>} : vector<8x16xbf16>, vector<16x128xbf16>, vector<8x128xf32> -> vector<8x128xf32>
    %c0_3 = arith.constant 0 : index
    %c0_4 = arith.constant 0 : index
    %3 = vector.load %arg3[%c0_3, %c0_4] : memref<1x128xf32, #tpu.memory_space<vmem>>, vector<1x128xf32>
    %4 = vector.broadcast %3 : vector<1x128xf32> to vector<8x128xf32>
    %5 = arith.addf %2, %4 : vector<8x128xf32>
    %cst_5 = arith.constant 0.000000e+00 : f32
    %6 = vector.broadcast %cst_5 : f32 to vector<8x128xf32>
    %7 = arith.maximumf %5, %6 : vector<8x128xf32>
    %8 = arith.truncf %7 : vector<8x128xf32> to vector<8x128xbf16>
    %c0_6 = arith.constant 0 : index
    %c0_7 = arith.constant 0 : index
    %9 = vector.load %arg4[%c0_6, %c0_7] : memref<128x128xbf16, #tpu.memory_space<vmem>>, vector<128x128xbf16>
    %cst_8 = arith.constant dense<0.000000e+00> : vector<8x128xf32>
    %10 = tpu.matmul %8, %9, %cst_8 {dimension_numbers = #tpu.dot_dimension_numbers<[1], [0], [0], [1], [0, 0, 1, 1], [], []>} : vector<8x128xbf16>, vector<128x128xbf16>, vector<8x128xf32> -> vector<8x128xf32>
    %c0_9 = arith.constant 0 : index
    %c0_10 = arith.constant 0 : index
    %11 = vector.load %arg5[%c0_9, %c0_10] : memref<1x128xf32, #tpu.memory_space<vmem>>, vector<1x128xf32>
    %12 = vector.broadcast %11 : vector<1x128xf32> to vector<8x128xf32>
    %13 = arith.addf %10, %12 : vector<8x128xf32>
    %cst_11 = arith.constant 0.000000e+00 : f32
    %14 = vector.broadcast %cst_11 : f32 to vector<8x128xf32>
    %15 = arith.maximumf %13, %14 : vector<8x128xf32>
    %16 = arith.truncf %15 : vector<8x128xf32> to vector<8x128xbf16>
    %c0_12 = arith.constant 0 : index
    %c0_13 = arith.constant 0 : index
    %17 = vector.load %arg6[%c0_12, %c0_13] : memref<128x128xbf16, #tpu.memory_space<vmem>>, vector<128x128xbf16>
    %cst_14 = arith.constant dense<0.000000e+00> : vector<8x128xf32>
    %18 = tpu.matmul %16, %17, %cst_14 {dimension_numbers = #tpu.dot_dimension_numbers<[1], [0], [0], [1], [0, 0, 1, 1], [], []>} : vector<8x128xbf16>, vector<128x128xbf16>, vector<8x128xf32> -> vector<8x128xf32>
    %c0_15 = arith.constant 0 : index
    %c0_16 = arith.constant 0 : index
    %19 = vector.load %arg7[%c0_15, %c0_16] : memref<1x128xf32, #tpu.memory_space<vmem>>, vector<1x128xf32>
    %20 = vector.broadcast %19 : vector<1x128xf32> to vector<8x128xf32>
    %21 = arith.addf %18, %20 : vector<8x128xf32>
    %cst_17 = arith.constant 0.000000e+00 : f32
    %22 = vector.broadcast %cst_17 : f32 to vector<8x128xf32>
    %23 = arith.maximumf %21, %22 : vector<8x128xf32>
    %24 = arith.truncf %23 : vector<8x128xf32> to vector<8x128xbf16>
    %c0_18 = arith.constant 0 : index
    %c0_19 = arith.constant 0 : index
    %25 = vector.load %arg8[%c0_18, %c0_19] : memref<128x128xbf16, #tpu.memory_space<vmem>>, vector<128x128xbf16>
    %cst_20 = arith.constant dense<0.000000e+00> : vector<8x128xf32>
    %26 = tpu.matmul %24, %25, %cst_20 {dimension_numbers = #tpu.dot_dimension_numbers<[1], [0], [0], [1], [0, 0, 1, 1], [], []>} : vector<8x128xbf16>, vector<128x128xbf16>, vector<8x128xf32> -> vector<8x128xf32>
    %c0_21 = arith.constant 0 : index
    %c0_22 = arith.constant 0 : index
    %27 = vector.load %arg9[%c0_21, %c0_22] : memref<1x128xf32, #tpu.memory_space<vmem>>, vector<1x128xf32>
    %28 = vector.broadcast %27 : vector<1x128xf32> to vector<8x128xf32>
    %29 = arith.addf %26, %28 : vector<8x128xf32>
    %cst_23 = arith.constant 0.000000e+00 : f32
    %30 = vector.broadcast %cst_23 : f32 to vector<8x128xf32>
    %31 = arith.maximumf %29, %30 : vector<8x128xf32>
    %32 = arith.truncf %31 : vector<8x128xf32> to vector<8x128xbf16>
    %c0_24 = arith.constant 0 : index
    %c0_25 = arith.constant 0 : index
    %33 = vector.load %arg10[%c0_24, %c0_25] : memref<128x8xbf16, #tpu.memory_space<vmem>>, vector<128x8xbf16>
    %cst_26 = arith.constant dense<0.000000e+00> : vector<8x8xf32>
    %34 = tpu.matmul %32, %33, %cst_26 {dimension_numbers = #tpu.dot_dimension_numbers<[1], [0], [0], [1], [0, 0, 1, 1], [], []>} : vector<8x128xbf16>, vector<128x8xbf16>, vector<8x8xf32> -> vector<8x8xf32>
    %c0_27 = arith.constant 0 : index
    %c0_28 = arith.constant 0 : index
    %35 = vector.load %arg11[%c0_27, %c0_28] : memref<1x8xf32, #tpu.memory_space<vmem>>, vector<1x8xf32>
    %36 = vector.broadcast %35 : vector<1x8xf32> to vector<8x8xf32>
    %37 = arith.addf %34, %36 : vector<8x8xf32>
    %c0_29 = arith.constant 0 : index
    %c0_30 = arith.constant 0 : index
    %38 = vector.load %arg12[%c0_29, %c0_30] : memref<8x8xf32, #tpu.memory_space<vmem>>, vector<8x8xf32>
    tpu.vector_store %arg12[%c0_29, %c0_30], %37 {strides = array<i32>} : memref<8x8xf32, #tpu.memory_space<vmem>>, vector<8x8xf32>,
    return
  }
  func.func @transform_0(%arg0: i32) -> (i32, i32) {
    %c0_i32 = arith.constant 0 : i32
    %c0_i32_0 = arith.constant 0 : i32
    return %arg0, %c0_i32 : i32, i32
  }
  func.func @transform_1(%arg0: i32) -> (i32, i32) {
    %c0_i32 = arith.constant 0 : i32
    %c0_i32_0 = arith.constant 0 : i32
    %c0_i32_1 = arith.constant 0 : i32
    return %c0_i32, %c0_i32_0 : i32, i32
  }
  func.func @transform_2(%arg0: i32) -> (i32, i32) {
    %c0_i32 = arith.constant 0 : i32
    %c0_i32_0 = arith.constant 0 : i32
    %c0_i32_1 = arith.constant 0 : i32
    return %c0_i32, %c0_i32_0 : i32, i32
  }
  func.func @transform_3(%arg0: i32) -> (i32, i32) {
    %c0_i32 = arith.constant 0 : i32
    %c0_i32_0 = arith.constant 0 : i32
    %c0_i32_1 = arith.constant 0 : i32
    return %c0_i32, %c0_i32_0 : i32, i32
  }
  func.func @transform_4(%arg0: i32) -> (i32, i32) {
    %c0_i32 = arith.constant 0 : i32
    %c0_i32_0 = arith.constant 0 : i32
    %c0_i32_1 = arith.constant 0 : i32
    return %c0_i32, %c0_i32_0 : i32, i32
  }
  func.func @transform_5(%arg0: i32) -> (i32, i32) {
    %c0_i32 = arith.constant 0 : i32
    %c0_i32_0 = arith.constant 0 : i32
    %c0_i32_1 = arith.constant 0 : i32
    return %c0_i32, %c0_i32_0 : i32, i32
  }
  func.func @transform_6(%arg0: i32) -> (i32, i32) {
    %c0_i32 = arith.constant 0 : i32
    %c0_i32_0 = arith.constant 0 : i32
    %c0_i32_1 = arith.constant 0 : i32
    return %c0_i32, %c0_i32_0 : i32, i32
  }
  func.func @transform_7(%arg0: i32) -> (i32, i32) {
    %c0_i32 = arith.constant 0 : i32
    %c0_i32_0 = arith.constant 0 : i32
    %c0_i32_1 = arith.constant 0 : i32
    return %c0_i32, %c0_i32_0 : i32, i32
  }
  func.func @transform_8(%arg0: i32) -> (i32, i32) {
    %c0_i32 = arith.constant 0 : i32
    %c0_i32_0 = arith.constant 0 : i32
    %c0_i32_1 = arith.constant 0 : i32
    return %c0_i32, %c0_i32_0 : i32, i32
  }
  func.func @transform_9(%arg0: i32) -> (i32, i32) {
    %c0_i32 = arith.constant 0 : i32
    %c0_i32_0 = arith.constant 0 : i32
    %c0_i32_1 = arith.constant 0 : i32
    return %c0_i32, %c0_i32_0 : i32, i32
  }
  func.func @transform_10(%arg0: i32) -> (i32, i32) {
    %c0_i32 = arith.constant 0 : i32
    %c0_i32_0 = arith.constant 0 : i32
    %c0_i32_1 = arith.constant 0 : i32
    return %c0_i32, %c0_i32_0 : i32, i32
  }
  func.func @transform_11(%arg0: i32) -> (i32, i32) {
    %c0_i32 = arith.constant 0 : i32
    %c0_i32_0 = arith.constant 0 : i32
    return %arg0, %c0_i32 : i32, i32
  }
}

</mosaic_0001>

<llo_original>
// kernel: four_layer_relu_forward.1
$region0: #{four_layer_relu_forward.1}
  #allocation0 [shape = 'u32[]', space=smem, size = 0x4, offset = 0x4, fixed_abs, tag = 'smem constant byte address 0x4 - core index']
  #allocation1 [shape = 'u32[144,128]{1,0:T(1,128)}', space=vmem, size = 0x12000, scoped, tag = 'internal scratch']
  %s0 = inlined_call_operand.vmem [shape: bf16[8,16], index: 0, kind: input, shape index: {}]
  %s1 = inlined_call_operand.vmem [shape: bf16[16,128], index: 1, kind: input, shape index: {}]
  %s2 = inlined_call_operand.vmem [shape: f32[1,128], index: 2, kind: input, shape index: {}]
  %s3 = inlined_call_operand.vmem [shape: bf16[128,128], index: 3, kind: input, shape index: {}]
  %s4 = inlined_call_operand.vmem [shape: f32[1,128], index: 4, kind: input, shape index: {}]
  %s5 = inlined_call_operand.hbm [shape: bf16[128,128], index: 5, kind: input, shape index: {}]
  %s6 = inlined_call_operand.vmem [shape: f32[1,128], index: 6, kind: input, shape index: {}]
  %s7 = inlined_call_operand.hbm [shape: bf16[128,128], index: 7, kind: input, shape index: {}]
  %s8 = inlined_call_operand.vmem [shape: f32[1,128], index: 8, kind: input, shape index: {}]
  %s9 = inlined_call_operand.vmem [shape: bf16[128,8], index: 9, kind: input, shape index: {}]
  %s10 = inlined_call_operand.vmem [shape: f32[1,8], index: 10, kind: input, shape index: {}]
  %s11 = inlined_call_operand.hbm [shape: f32[8,8], index: 11, kind: output, shape index: {}]
  %s12 = sld [smem:[#allocation0]]
  $region62: #{four_layer_relu_forward.1} parent=0
    _
  %s14 = ssub.s32 1, %s12
  %s15 = scalar_select 0, %s14, %s12
  $region1: #{four_layer_relu_forward.1} parent=0
    #allocation2 [shape = 'u8[32768]{0}', space=vmem, size = 0x8000, scoped, tag = 'input window, operand 5, single buffered']
    #allocation3 [shape = 's32[1]{0}', space=sflag, size = 0x4, scoped, tag = 'scoped memory for four_layer_relu_forward.1']
    #allocation4 [shape = 's32[1]{0}', space=sflag, size = 0x4, scoped, tag = 'scoped memory for four_layer_relu_forward.1']
    #allocation5 [shape = 'u8[32768]{0}', space=vmem, size = 0x8000, scoped, tag = 'input window, operand 7, single buffered']
    #allocation6 [shape = 's32[1]{0}', space=sflag, size = 0x4, scoped, tag = 'scoped memory for four_layer_relu_forward.1']
    #allocation7 [shape = 'u8[4096]{0}', space=vmem, size = 0x1000, scoped, tag = 'output window, operand 0, single buffered']
    %16 = vsyncpa [#allocation3], 0
    %17 = vsyncpa [#allocation6], 0
    %18 = vsyncpa [#allocation4], 0
    // Predicated region
    $region2: #{four_layer_relu_forward.1} parent=1 // pred_check
      _
    $region3: #{four_layer_relu_forward.1} parent=1 // pred_check_branch
      %20 = sbr.rel (0) target = $region5
    $region4: #{four_layer_relu_forward.1} parent=1 // pred_region
      _
    $region5: #{four_layer_relu_forward.1} parent=1 // pred_fallthru
      _
    // Predicated region
    $region6: #{four_layer_relu_forward.1} parent=1 // pred_check
      _
    $region7: #{four_layer_relu_forward.1} parent=1 // pred_check_branch
      %22 = sbr.rel (0) target = $region9
    $region8: #{four_layer_relu_forward.1} parent=1 // pred_region
      _
    $region9: #{four_layer_relu_forward.1} parent=1 // pred_fallthru
      _
    // Predicated region
    $region10: #{four_layer_relu_forward.1} parent=1 // pred_check
      _
    $region11: #{four_layer_relu_forward.1} parent=1 // pred_check_branch
      %24 = sbr.rel (0) target = $region13
    $region12: #{four_layer_relu_forward.1} parent=1 // pred_region
      _
    $region13: #{four_layer_relu_forward.1} parent=1 // pred_fallthru
      _
    // Predicated region
    $region14: #{four_layer_relu_forward.1} parent=1 // pred_check
      _
    $region15: #{four_layer_relu_forward.1} parent=1 // pred_check_branch
      %26 = sbr.rel (0) target = $region17
    $region16: #{four_layer_relu_forward.1} parent=1 // pred_region
      _
    $region17: #{four_layer_relu_forward.1} parent=1 // pred_fallthru
      _
    // Predicated region
    $region18: #{four_layer_relu_forward.1} parent=1 // pred_check
      _
    $region19: #{four_layer_relu_forward.1} parent=1 // pred_check_branch
      %28 = sbr.rel (0) target = $region21
    $region20: #{four_layer_relu_forward.1} parent=1 // pred_region
      _
    $region21: #{four_layer_relu_forward.1} parent=1 // pred_fallthru
      _
    // Predicated region
    $region22: #{four_layer_relu_forward.1} parent=1 // pred_check
      _
    $region23: #{four_layer_relu_forward.1} parent=1 // pred_check_branch
      %30 = sbr.rel (0) target = $region25
    $region24: #{four_layer_relu_forward.1} parent=1 // pred_region
      %s32 = ssub.s32 1024, 1024
      %33 = vsyncadd [#allocation3], %s32
      %s34 = sshll.u32 [#allocation2], 4
      %s35 = int_to_ptr.vmem [resolvable:$true] %s34
      %40 = dma.hbm_to_vmem [thread:$0]  %s5, 1024, %s35, [#allocation3], 64, 64, 4
    $region25: #{four_layer_relu_forward.1} parent=1 // pred_fallthru
      _
    // Predicated region
    $region26: #{four_layer_relu_forward.1} parent=1 // pred_check
      _
    $region27: #{four_layer_relu_forward.1} parent=1 // pred_check_branch
      %42 = sbr.rel (0) target = $region29
    $region28: #{four_layer_relu_forward.1} parent=1 // pred_region
      _
    $region29: #{four_layer_relu_forward.1} parent=1 // pred_fallthru
      _
    // Predicated region
    $region30: #{four_layer_relu_forward.1} parent=1 // pred_check
      _
    $region31: #{four_layer_relu_forward.1} parent=1 // pred_check_branch
      %44 = sbr.rel (0) target = $region33
    $region32: #{four_layer_relu_forward.1} parent=1 // pred_region
      %s46 = ssub.s32 1024, 1024
      %47 = vsyncadd [#allocation6], %s46
      %s48 = sshll.u32 [#allocation5], 4
      %s49 = int_to_ptr.vmem [resolvable:$true] %s48
      %54 = dma.hbm_to_vmem [thread:$0]  %s7, 1024, %s49, [#allocation6], 64, 64, 4
    $region33: #{four_layer_relu_forward.1} parent=1 // pred_fallthru
      _
    // Predicated region
    $region34: #{four_layer_relu_forward.1} parent=1 // pred_check
      _
    $region35: #{four_layer_relu_forward.1} parent=1 // pred_check_branch
      %56 = sbr.rel (0) target = $region37
    $region36: #{four_layer_relu_forward.1} parent=1 // pred_region
      _
    $region37: #{four_layer_relu_forward.1} parent=1 // pred_fallthru
      _
    // Predicated region
    $region38: #{four_layer_relu_forward.1} parent=1 // pred_check
      _
    $region39: #{four_layer_relu_forward.1} parent=1 // pred_check_branch
      %58 = sbr.rel (0) target = $region41
    $region40: #{four_layer_relu_forward.1} parent=1 // pred_region
      _
    $region41: #{four_layer_relu_forward.1} parent=1 // pred_fallthru
      _
    // Predicated region
    $region42: #{four_layer_relu_forward.1} parent=1 // pred_check
      _
    $region43: #{four_layer_relu_forward.1} parent=1 // pred_check_branch
      %60 = sbr.rel (0) target = $region45
    $region44: #{four_layer_relu_forward.1} parent=1 // pred_region
      _
    $region45: #{four_layer_relu_forward.1} parent=1 // pred_fallthru
      _
    // Predicated region
    $region46: #{four_layer_relu_forward.1} parent=1 // pred_check
      _
    $region47: #{four_layer_relu_forward.1} parent=1 // pred_check_branch
      %62 = sbr.rel (0) target = $region49
    $region48: #{four_layer_relu_forward.1} parent=1 // pred_region
      %63 = dma.done [#allocation3], 1024
    $region49: #{four_layer_relu_forward.1} parent=1 // pred_fallthru
      _
    // Predicated region
    $region50: #{four_layer_relu_forward.1} parent=1 // pred_check
      _
    $region51: #{four_layer_relu_forward.1} parent=1 // pred_check_branch
      %65 = sbr.rel (0) target = $region53
    $region52: #{four_layer_relu_forward.1} parent=1 // pred_region
      %66 = dma.done [#allocation6], 1024
    $region53: #{four_layer_relu_forward.1} parent=1 // pred_fallthru
      _
    %v68 = vld [vmem:[%s0] sm:$0xf]
    %v69 = vld [vmem:[%s1] sm:$0xf]
    %v70 = vld [vmem:[%s1 + $0x4] sm:$0xf]
    %v71 = vld [vmem:[%s2] sm:$0x1]
    %v73 = vlaneseq
    %v74 = vshrl.u32 %v73, 7
    %v75 = vsub.s32 0, %v74
    %v76 = vrot.slane %v71, %v75
    %v80 = vunpack.c.l.b16 %v69
    %v81 = vunpack.c.l.b16 %v70
    %v82 = vpack.c.b16 %v81, %v80
    %vm84 = vcmask 130048
    %v86 = vsel %vm84, %v68, 0
    %88 = vmatprep.subr.bf16.mxu0 0
    %89 = vmatpush1.bf16.msra.mxu0 %v82
    %90 = vmatprep.subr.bf16.mxu0 0
    %91 = vmatpush1.bf16.msra.mxu0 0
    %92 = vmatprep.subr.bf16.mxu0 0
    %93 = vmatpush1.bf16.msra.mxu0 0
    %94 = vmatprep.subr.bf16.mxu0 0
    %95 = vmatpush1.bf16.msra.mxu0 0
    %96 = vmatprep.subr.bf16.mxu0 0
    %97 = vmatpush1.bf16.msra.mxu0 0
    %98 = vmatprep.subr.bf16.mxu0 0
    %99 = vmatpush1.bf16.msra.mxu0 0
    %100 = vmatprep.subr.bf16.mxu0 0
    %101 = vmatpush1.bf16.msra.mxu0 0
    %102 = vmatprep.subr.bf16.mxu0 0
    %103 = vmatpush1.bf16.msra.mxu0 0
    %104 = vmatprep.subr.bf16.mxu0 0
    %105 = vmatpush1.bf16.msra.mxu0 0
    %106 = vmatprep.subr.bf16.mxu0 0
    %107 = vmatpush1.bf16.msra.mxu0 0
    %108 = vmatprep.subr.bf16.mxu0 0
    %109 = vmatpush1.bf16.msra.mxu0 0
    %110 = vmatprep.subr.bf16.mxu0 0
    %111 = vmatpush1.bf16.msra.mxu0 0
    %112 = vmatprep.subr.bf16.mxu0 0
    %113 = vmatpush1.bf16.msra.mxu0 0
    %114 = vmatprep.subr.bf16.mxu0 0
    %115 = vmatpush1.bf16.msra.mxu0 0
    %116 = vmatprep.subr.bf16.mxu0 0
    %117 = vmatpush1.bf16.msra.mxu0 0
    %118 = vmatprep.subr.bf16.mxu0 0
    %119 = vmatpush1.bf16.msra.mxu0 0
    %120 = vmatprep.mubr.bf16.mxu0 0
    %121 = vmatmul.mubr.bf16.gmra.mrb[0].mxu0 %v86
    %v122 = vpop.f32.mrb[0].mxu0
    %v123 = vadd.f32 %v76, %v122
    %v124 = vpop.f32.mrb[0].mxu0
    %v125 = vpop.f32.mrb[0].mxu0
    %v126 = vpop.f32.mrb[0].mxu0
    %127 = vdwg.mxu0
    %v128 = vmax.f32 %v123, 0.0
    %v129 = vpack.c.bf16 %v128, %v128
    %v130 = vld [vmem:[%s3] sm:$0xf]
    %v131 = vld [vmem:[%s3 + $0x4] sm:$0xf]
    %v132 = vld [vmem:[%s3 + $0x8] sm:$0xf]
    %v133 = vld [vmem:[%s3 + $0xc] sm:$0xf]
    %v134 = vld [vmem:[%s3 + $0x10] sm:$0xf]
    %v135 = vld [vmem:[%s3 + $0x14] sm:$0xf]
    %v136 = vld [vmem:[%s3 + $0x18] sm:$0xf]
    %v137 = vld [vmem:[%s3 + $0x1c] sm:$0xf]
    %v138 = vld [vmem:[%s3 + $0x20] sm:$0xf]
    %v139 = vld [vmem:[%s3 + $0x24] sm:$0xf]
    %v140 = vld [vmem:[%s3 + $0x28] sm:$0xf]
    %v141 = vld [vmem:[%s3 + $0x2c] sm:$0xf]
    %v142 = vld [vmem:[%s3 + $0x30] sm:$0xf]
    %v143 = vld [vmem:[%s3 + $0x34] sm:$0xf]
    %v144 = vld [vmem:[%s3 + $0x38] sm:$0xf]
    %v145 = vld [vmem:[%s3 + $0x3c] sm:$0xf]
    %v146 = vld [vmem:[%s4] sm:$0x1]
    %v148 = vlaneseq
    %v149 = vshrl.u32 %v148, 7
    %v150 = vsub.s32 0, %v149
    %v151 = vrot.slane %v146, %v150
    %v169 = vunpack.c.l.b16 %v130
    %v170 = vunpack.c.l.b16 %v131
    %v171 = vunpack.c.l.b16 %v132
    %v172 = vunpack.c.l.b16 %v133
    %v173 = vunpack.c.l.b16 %v134
    %v174 = vunpack.c.l.b16 %v135
    %v175 = vunpack.c.l.b16 %v136
    %v176 = vunpack.c.l.b16 %v137
    %v177 = vunpack.c.l.b16 %v138
    %v178 = vunpack.c.l.b16 %v139
    %v179 = vunpack.c.l.b16 %v140
    %v180 = vunpack.c.l.b16 %v141
    %v181 = vunpack.c.l.b16 %v142
    %v182 = vunpack.c.l.b16 %v143
    %v183 = vunpack.c.l.b16 %v144
    %v184 = vunpack.c.l.b16 %v145
    %v185 = vpack.c.b16 %v170, %v169
    %v186 = vpack.c.b16 %v172, %v171
    %v187 = vpack.c.b16 %v174, %v173
    %v188 = vpack.c.b16 %v176, %v175
    %v189 = vpack.c.b16 %v178, %v177
    %v190 = vpack.c.b16 %v180, %v179
    %v191 = vpack.c.b16 %v182, %v181
    %v192 = vpack.c.b16 %v184, %v183
    %201 = vmatprep.subr.bf16.mxu0 0
    %202 = vmatpush1.bf16.msra.mxu0 %v185
    %203 = vmatprep.subr.bf16.mxu0 0
    %204 = vmatpush1.bf16.msra.mxu0 %v186
    %205 = vmatprep.subr.bf16.mxu0 0
    %206 = vmatpush1.bf16.msra.mxu0 %v187
    %207 = vmatprep.subr.bf16.mxu0 0
    %208 = vmatpush1.bf16.msra.mxu0 %v188
    %209 = vmatprep.subr.bf16.mxu0 0
    %210 = vmatpush1.bf16.msra.mxu0 %v189
    %211 = vmatprep.subr.bf16.mxu0 0
    %212 = vmatpush1.bf16.msra.mxu0 %v190
    %213 = vmatprep.subr.bf16.mxu0 0
    %214 = vmatpush1.bf16.msra.mxu0 %v191
    %215 = vmatprep.subr.bf16.mxu0 0
    %216 = vmatpush1.bf16.msra.mxu0 %v192
    %217 = vmatprep.subr.bf16.mxu0 0
    %218 = vmatpush1.bf16.msra.mxu0 0
    %219 = vmatprep.subr.bf16.mxu0 0
    %220 = vmatpush1.bf16.msra.mxu0 0
    %221 = vmatprep.subr.bf16.mxu0 0
    %222 = vmatpush1.bf16.msra.mxu0 0
    %223 = vmatprep.subr.bf16.mxu0 0
    %224 = vmatpush1.bf16.msra.mxu0 0
    %225 = vmatprep.subr.bf16.mxu0 0
    %226 = vmatpush1.bf16.msra.mxu0 0
    %227 = vmatprep.subr.bf16.mxu0 0
    %228 = vmatpush1.bf16.msra.mxu0 0
    %229 = vmatprep.subr.bf16.mxu0 0
    %230 = vmatpush1.bf16.msra.mxu0 0
    %231 = vmatprep.subr.bf16.mxu0 0
    %232 = vmatpush1.bf16.msra.mxu0 0
    %233 = vmatprep.mubr.bf16.mxu0 0
    %234 = vmatmul.mubr.bf16.gmra.mrb[0].mxu0 %v129
    %v235 = vpop.f32.mrb[0].mxu0
    %v236 = vadd.f32 %v151, %v235
    %v237 = vpop.f32.mrb[0].mxu0
    %v238 = vpop.f32.mrb[0].mxu0
    %v239 = vpop.f32.mrb[0].mxu0
    %240 = vdwg.mxu0
    %v241 = vmax.f32 %v236, 0.0
    %v242 = vpack.c.bf16 %v241, %v241
    %v243 = vld [vmem:[#allocation2] sm:$0xf]
    %v244 = vld [vmem:[#allocation2 + $0x4] sm:$0xf]
    %v245 = vld [vmem:[#allocation2 + $0x8] sm:$0xf]
    %v246 = vld [vmem:[#allocation2 + $0xc] sm:$0xf]
    %v247 = vld [vmem:[#allocation2 + $0x10] sm:$0xf]
    %v248 = vld [vmem:[#allocation2 + $0x14] sm:$0xf]
    %v249 = vld [vmem:[#allocation2 + $0x18] sm:$0xf]
    %v250 = vld [vmem:[#allocation2 + $0x1c] sm:$0xf]
    %v251 = vld [vmem:[#allocation2 + $0x20] sm:$0xf]
    %v252 = vld [vmem:[#allocation2 + $0x24] sm:$0xf]
    %v253 = vld [vmem:[#allocation2 + $0x28] sm:$0xf]
    %v254 = vld [vmem:[#allocation2 + $0x2c] sm:$0xf]
    %v255 = vld [vmem:[#allocation2 + $0x30] sm:$0xf]
    %v256 = vld [vmem:[#allocation2 + $0x34] sm:$0xf]
    %v257 = vld [vmem:[#allocation2 + $0x38] sm:$0xf]
    %v258 = vld [vmem:[#allocation2 + $0x3c] sm:$0xf]
    %v259 = vld [vmem:[%s6] sm:$0x1]
    %v261 = vlaneseq
    %v262 = vshrl.u32 %v261, 7
    %v263 = vsub.s32 0, %v262
    %v264 = vrot.slane %v259, %v263
    %v282 = vunpack.c.l.b16 %v243
    %v283 = vunpack.c.l.b16 %v244
    %v284 = vunpack.c.l.b16 %v245
    %v285 = vunpack.c.l.b16 %v246
    %v286 = vunpack.c.l.b16 %v247
    %v287 = vunpack.c.l.b16 %v248
    %v288 = vunpack.c.l.b16 %v249
    %v289 = vunpack.c.l.b16 %v250
    %v290 = vunpack.c.l.b16 %v251
    %v291 = vunpack.c.l.b16 %v252
    %v292 = vunpack.c.l.b16 %v253
    %v293 = vunpack.c.l.b16 %v254
    %v294 = vunpack.c.l.b16 %v255
    %v295 = vunpack.c.l.b16 %v256
    %v296 = vunpack.c.l.b16 %v257
    %v297 = vunpack.c.l.b16 %v258
    %v298 = vpack.c.b16 %v283, %v282
    %v299 = vpack.c.b16 %v285, %v284
    %v300 = vpack.c.b16 %v287, %v286
    %v301 = vpack.c.b16 %v289, %v288
    %v302 = vpack.c.b16 %v291, %v290
    %v303 = vpack.c.b16 %v293, %v292
    %v304 = vpack.c.b16 %v295, %v294
    %v305 = vpack.c.b16 %v297, %v296
    %314 = vmatprep.subr.bf16.mxu0 0
    %315 = vmatpush1.bf16.msra.mxu0 %v298
    %316 = vmatprep.subr.bf16.mxu0 0
    %317 = vmatpush1.bf16.msra.mxu0 %v299
    %318 = vmatprep.subr.bf16.mxu0 0
    %319 = vmatpush1.bf16.msra.mxu0 %v300
    %320 = vmatprep.subr.bf16.mxu0 0
    %321 = vmatpush1.bf16.msra.mxu0 %v301
    %322 = vmatprep.subr.bf16.mxu0 0
    %323 = vmatpush1.bf16.msra.mxu0 %v302
    %324 = vmatprep.subr.bf16.mxu0 0
    %325 = vmatpush1.bf16.msra.mxu0 %v303
    %326 = vmatprep.subr.bf16.mxu0 0
    %327 = vmatpush1.bf16.msra.mxu0 %v304
    %328 = vmatprep.subr.bf16.mxu0 0
    %329 = vmatpush1.bf16.msra.mxu0 %v305
    %330 = vmatprep.subr.bf16.mxu0 0
    %331 = vmatpush1.bf16.msra.mxu0 0
    %332 = vmatprep.subr.bf16.mxu0 0
    %333 = vmatpush1.bf16.msra.mxu0 0
    %334 = vmatprep.subr.bf16.mxu0 0
    %335 = vmatpush1.bf16.msra.mxu0 0
    %336 = vmatprep.subr.bf16.mxu0 0
    %337 = vmatpush1.bf16.msra.mxu0 0
    %338 = vmatprep.subr.bf16.mxu0 0
    %339 = vmatpush1.bf16.msra.mxu0 0
    %340 = vmatprep.subr.bf16.mxu0 0
    %341 = vmatpush1.bf16.msra.mxu0 0
    %342 = vmatprep.subr.bf16.mxu0 0
    %343 = vmatpush1.bf16.msra.mxu0 0
    %344 = vmatprep.subr.bf16.mxu0 0
    %345 = vmatpush1.bf16.msra.mxu0 0
    %346 = vmatprep.mubr.bf16.mxu0 0
    %347 = vmatmul.mubr.bf16.gmra.mrb[0].mxu0 %v242
    %v348 = vpop.f32.mrb[0].mxu0
    %v349 = vadd.f32 %v264, %v348
    %v350 = vpop.f32.mrb[0].mxu0
    %v351 = vpop.f32.mrb[0].mxu0
    %v352 = vpop.f32.mrb[0].mxu0
    %353 = vdwg.mxu0
    %v354 = vmax.f32 %v349, 0.0
    %v355 = vpack.c.bf16 %v354, %v354
    %v356 = vld [vmem:[#allocation5] sm:$0xf]
    %v357 = vld [vmem:[#allocation5 + $0x4] sm:$0xf]
    %v358 = vld [vmem:[#allocation5 + $0x8] sm:$0xf]
    %v359 = vld [vmem:[#allocation5 + $0xc] sm:$0xf]
    %v360 = vld [vmem:[#allocation5 + $0x10] sm:$0xf]
    %v361 = vld [vmem:[#allocation5 + $0x14] sm:$0xf]
    %v362 = vld [vmem:[#allocation5 + $0x18] sm:$0xf]
    %v363 = vld [vmem:[#allocation5 + $0x1c] sm:$0xf]
    %v364 = vld [vmem:[#allocation5 + $0x20] sm:$0xf]
    %v365 = vld [vmem:[#allocation5 + $0x24] sm:$0xf]
    %v366 = vld [vmem:[#allocation5 + $0x28] sm:$0xf]
    %v367 = vld [vmem:[#allocation5 + $0x2c] sm:$0xf]
    %v368 = vld [vmem:[#allocation5 + $0x30] sm:$0xf]
    %v369 = vld [vmem:[#allocation5 + $0x34] sm:$0xf]
    %v370 = vld [vmem:[#allocation5 + $0x38] sm:$0xf]
    %v371 = vld [vmem:[#allocation5 + $0x3c] sm:$0xf]
    %v372 = vld [vmem:[%s8] sm:$0x1]
    %v374 = vlaneseq
    %v375 = vshrl.u32 %v374, 7
    %v376 = vsub.s32 0, %v375
    %v377 = vrot.slane %v372, %v376
    %v395 = vunpack.c.l.b16 %v356
    %v396 = vunpack.c.l.b16 %v357
    %v397 = vunpack.c.l.b16 %v358
    %v398 = vunpack.c.l.b16 %v359
    %v399 = vunpack.c.l.b16 %v360
    %v400 = vunpack.c.l.b16 %v361
    %v401 = vunpack.c.l.b16 %v362
    %v402 = vunpack.c.l.b16 %v363
    %v403 = vunpack.c.l.b16 %v364
    %v404 = vunpack.c.l.b16 %v365
    %v405 = vunpack.c.l.b16 %v366
    %v406 = vunpack.c.l.b16 %v367
    %v407 = vunpack.c.l.b16 %v368
    %v408 = vunpack.c.l.b16 %v369
    %v409 = vunpack.c.l.b16 %v370
    %v410 = vunpack.c.l.b16 %v371
    %v411 = vpack.c.b16 %v396, %v395
    %v412 = vpack.c.b16 %v398, %v397
    %v413 = vpack.c.b16 %v400, %v399
    %v414 = vpack.c.b16 %v402, %v401
    %v415 = vpack.c.b16 %v404, %v403
    %v416 = vpack.c.b16 %v406, %v405
    %v417 = vpack.c.b16 %v408, %v407
    %v418 = vpack.c.b16 %v410, %v409
    %427 = vmatprep.subr.bf16.mxu0 0
    %428 = vmatpush1.bf16.msra.mxu0 %v411
    %429 = vmatprep.subr.bf16.mxu0 0
    %430 = vmatpush1.bf16.msra.mxu0 %v412
    %431 = vmatprep.subr.bf16.mxu0 0
    %432 = vmatpush1.bf16.msra.mxu0 %v413
    %433 = vmatprep.subr.bf16.mxu0 0
    %434 = vmatpush1.bf16.msra.mxu0 %v414
    %435 = vmatprep.subr.bf16.mxu0 0
    %436 = vmatpush1.bf16.msra.mxu0 %v415
    %437 = vmatprep.subr.bf16.mxu0 0
    %438 = vmatpush1.bf16.msra.mxu0 %v416
    %439 = vmatprep.subr.bf16.mxu0 0
    %440 = vmatpush1.bf16.msra.mxu0 %v417
    %441 = vmatprep.subr.bf16.mxu0 0
    %442 = vmatpush1.bf16.msra.mxu0 %v418
    %443 = vmatprep.subr.bf16.mxu0 0
    %444 = vmatpush1.bf16.msra.mxu0 0
    %445 = vmatprep.subr.bf16.mxu0 0
    %446 = vmatpush1.bf16.msra.mxu0 0
    %447 = vmatprep.subr.bf16.mxu0 0
    %448 = vmatpush1.bf16.msra.mxu0 0
    %449 = vmatprep.subr.bf16.mxu0 0
    %450 = vmatpush1.bf16.msra.mxu0 0
    %451 = vmatprep.subr.bf16.mxu0 0
    %452 = vmatpush1.bf16.msra.mxu0 0
    %453 = vmatprep.subr.bf16.mxu0 0
    %454 = vmatpush1.bf16.msra.mxu0 0
    %455 = vmatprep.subr.bf16.mxu0 0
    %456 = vmatpush1.bf16.msra.mxu0 0
    %457 = vmatprep.subr.bf16.mxu0 0
    %458 = vmatpush1.bf16.msra.mxu0 0
    %459 = vmatprep.mubr.bf16.mxu0 0
    %460 = vmatmul.mubr.bf16.gmra.mrb[0].mxu0 %v355
    %v461 = vpop.f32.mrb[0].mxu0
    %v462 = vadd.f32 %v377, %v461
    %v463 = vpop.f32.mrb[0].mxu0
    %v464 = vpop.f32.mrb[0].mxu0
    %v465 = vpop.f32.mrb[0].mxu0
    %466 = vdwg.mxu0
    %v467 = vmax.f32 %v462, 0.0
    %v468 = vpack.c.bf16 %v467, %v467
    %v469 = vld [vmem:[%s9] sm:$0xf]
    %v470 = vld [vmem:[%s9 + $0x4] sm:$0xf]
    %v471 = vld [vmem:[%s9 + $0x8] sm:$0xf]
    %v472 = vld [vmem:[%s9 + $0xc] sm:$0xf]
    %v473 = vld [vmem:[%s9 + $0x10] sm:$0xf]
    %v474 = vld [vmem:[%s9 + $0x14] sm:$0xf]
    %v475 = vld [vmem:[%s9 + $0x18] sm:$0xf]
    %v476 = vld [vmem:[%s9 + $0x1c] sm:$0xf]
    %v477 = vld [vmem:[%s9 + $0x20] sm:$0xf]
    %v478 = vld [vmem:[%s9 + $0x24] sm:$0xf]
    %v479 = vld [vmem:[%s9 + $0x28] sm:$0xf]
    %v480 = vld [vmem:[%s9 + $0x2c] sm:$0xf]
    %v481 = vld [vmem:[%s9 + $0x30] sm:$0xf]
    %v482 = vld [vmem:[%s9 + $0x34] sm:$0xf]
    %v483 = vld [vmem:[%s9 + $0x38] sm:$0xf]
    %v484 = vld [vmem:[%s9 + $0x3c] sm:$0xf]
    %v485 = vld [vmem:[%s10] sm:$0x1]
    %v487 = vlaneseq
    %v488 = vshrl.u32 %v487, 7
    %v489 = vsub.s32 0, %v488
    %v490 = vrot.slane %v485, %v489
    %v508 = vunpack.c.l.b16 %v469
    %v509 = vunpack.c.l.b16 %v470
    %v510 = vunpack.c.l.b16 %v471
    %v511 = vunpack.c.l.b16 %v472
    %v512 = vunpack.c.l.b16 %v473
    %v513 = vunpack.c.l.b16 %v474
    %v514 = vunpack.c.l.b16 %v475
    %v515 = vunpack.c.l.b16 %v476
    %v516 = vunpack.c.l.b16 %v477
    %v517 = vunpack.c.l.b16 %v478
    %v518 = vunpack.c.l.b16 %v479
    %v519 = vunpack.c.l.b16 %v480
    %v520 = vunpack.c.l.b16 %v481
    %v521 = vunpack.c.l.b16 %v482
    %v522 = vunpack.c.l.b16 %v483
    %v523 = vunpack.c.l.b16 %v484
    %v524 = vpack.c.b16 %v509, %v508
    %v525 = vpack.c.b16 %v511, %v510
    %v526 = vpack.c.b16 %v513, %v512
    %v527 = vpack.c.b16 %v515, %v514
    %v528 = vpack.c.b16 %v517, %v516
    %v529 = vpack.c.b16 %v519, %v518
    %v530 = vpack.c.b16 %v521, %v520
    %v531 = vpack.c.b16 %v523, %v522
    %540 = vmatprep.subr.bf16.mxu0 0
    %541 = vmatpush1.bf16.msra.mxu0 %v524
    %542 = vmatprep.subr.bf16.mxu0 0
    %543 = vmatpush1.bf16.msra.mxu0 %v525
    %544 = vmatprep.subr.bf16.mxu0 0
    %545 = vmatpush1.bf16.msra.mxu0 %v526
    %546 = vmatprep.subr.bf16.mxu0 0
    %547 = vmatpush1.bf16.msra.mxu0 %v527
    %548 = vmatprep.subr.bf16.mxu0 0
    %549 = vmatpush1.bf16.msra.mxu0 %v528
    %550 = vmatprep.subr.bf16.mxu0 0
    %551 = vmatpush1.bf16.msra.mxu0 %v529
    %552 = vmatprep.subr.bf16.mxu0 0
    %553 = vmatpush1.bf16.msra.mxu0 %v530
    %554 = vmatprep.subr.bf16.mxu0 0
    %555 = vmatpush1.bf16.msra.mxu0 %v531
    %556 = vmatprep.subr.bf16.mxu0 0
    %557 = vmatpush1.bf16.msra.mxu0 0
    %558 = vmatprep.subr.bf16.mxu0 0
    %559 = vmatpush1.bf16.msra.mxu0 0
    %560 = vmatprep.subr.bf16.mxu0 0
    %561 = vmatpush1.bf16.msra.mxu0 0
    %562 = vmatprep.subr.bf16.mxu0 0
    %563 = vmatpush1.bf16.msra.mxu0 0
    %564 = vmatprep.subr.bf16.mxu0 0
    %565 = vmatpush1.bf16.msra.mxu0 0
    %566 = vmatprep.subr.bf16.mxu0 0
    %567 = vmatpush1.bf16.msra.mxu0 0
    %568 = vmatprep.subr.bf16.mxu0 0
    %569 = vmatpush1.bf16.msra.mxu0 0
    %570 = vmatprep.subr.bf16.mxu0 0
    %571 = vmatpush1.bf16.msra.mxu0 0
    %572 = vmatprep.mubr.bf16.mxu0 0
    %573 = vmatmul.mubr.bf16.gmra.mrb[0].mxu0 %v468
    %v574 = vpop.f32.mrb[0].mxu0
    %v575 = vadd.f32 %v490, %v574
    %v576 = vpop.f32.mrb[0].mxu0
    %v577 = vpop.f32.mrb[0].mxu0
    %v578 = vpop.f32.mrb[0].mxu0
    %579 = vdwg.mxu0
    %vm580 = vcmask 64512
    %581 = vst.msk [vmem:[#allocation7] sm:$0xff] %vm580, %v575
    // Predicated region
    $region54: #{four_layer_relu_forward.1} parent=1 // pred_check
      _
    $region55: #{four_layer_relu_forward.1} parent=1 // pred_check_branch
      %583 = sbr.rel (0) target = $region57
    $region56: #{four_layer_relu_forward.1} parent=1 // pred_region
      %s585 = ssub.s32 128, 128
      %586 = vsyncadd [#allocation4], %s585
      %s588 = sshll.u32 [#allocation7], 4
      %s589 = int_to_ptr.vmem [resolvable:$true] %s588
      %591 = dma.vmem_to_hbm [thread:$0]  %s589, 128, %s11, [#allocation4]
    $region57: #{four_layer_relu_forward.1} parent=1 // pred_fallthru
      _
    // Predicated region
    $region58: #{four_layer_relu_forward.1} parent=1 // pred_check
      _
    $region59: #{four_layer_relu_forward.1} parent=1 // pred_check_branch
      %593 = sbr.rel (0) target = $region61
    $region60: #{four_layer_relu_forward.1} parent=1 // pred_region
      %594 = dma.done [#allocation4], 128
    $region61: #{four_layer_relu_forward.1} parent=1 // pred_fallthru
      _
    %595 = vsyncpa [#allocation3], 1
    %596 = vsyncpa [#allocation6], 1
    %597 = vsyncpa [#allocation4], 1

</llo_original>
